<compile_context>
chip_gen: v7x
topology: tpu7x:2x2x1
jax: 0.10.0
libtpu: 0.0.40
codegen_flags: <defaults>
</compile_context>

<pallas_src>
import functools

import jax
import jax.numpy as jnp
from jax.experimental import pallas as pl
from jax.experimental.pallas import tpu as pltpu

LEAKY_SLOPE = 0.3
ROW_TILE = 512  # max batch rows per grid step (sublane-aligned, ~85% HBM roofline on v6e)


def _leaky(x):
    # F.leaky_relu(x, 0.3)
    return jnp.where(x >= 0, x, LEAKY_SLOPE * x)


def _silu(x):
    # F.silu(x) = x * sigmoid(x)  (sigmoid lowers to the EUP slot)
    return x * jax.nn.sigmoid(x)


def _round_up(n, m):
    return ((n + m - 1) // m) * m


def _choose_row_tile(B):
    """Pick (row_tile, padded_batch).

    Goals: sublane-aligned tiles, >=2 grid steps when the batch allows (keeps both
    v7x TensorCores busy), tiles as large as ROW_TILE for HBM-roofline efficiency,
    and — when possible — a tile that divides the 8-padded batch so no large
    jnp.pad / slice copies are needed.
    """
    Bp8 = _round_up(max(B, 1), 8)
    if Bp8 <= 8:
        return Bp8, Bp8
    # at least two grid steps, capped at ROW_TILE
    tb = min(ROW_TILE, _round_up((Bp8 + 1) // 2, 8))
    # prefer a tile that exactly divides the 8-padded batch (no big pad copy);
    # do not shrink below half the cap just to avoid a handful of padded rows.
    floor = max(8, tb // 2)
    for cand in range(tb, floor - 1, -8):
        if Bp8 % cand == 0:
            return cand, Bp8
    return tb, _round_up(Bp8, tb)


# -----------------------------------------------------------------------------
# Fused kernel: one tile of `tb` batch rows per grid step.
#   x_ref  : [tb, n_embd]      f32 input rows
#   w1_ref : [n_embd, hidden]  f32   (hidden = 2 * n_embd)
#   b1_ref : [1, hidden]       f32
#   w2_ref : [hidden, hidden]  bf16
#   b2_ref : [1, hidden]       f32
#   o_ref  : [tb, hidden]      f32 (or bf16) output
# -----------------------------------------------------------------------------
def time_embedding_kernel(x_ref, w1_ref, b1_ref, w2_ref, b2_ref, o_ref):
    # linear_1: fully f32 (K = n_embd is small, keeps numerics tight) + bias
    h = jnp.dot(x_ref[...], w1_ref[...], preferred_element_type=jnp.float32)
    h = h + b1_ref[...]
    # leaky -> silu, all f32 elementwise
    h = _silu(_leaky(h))
    # linear_2: only the hidden activation is cast to bf16 for the MXU, f32 accumulate
    y = jnp.dot(h.astype(jnp.bfloat16), w2_ref[...], preferred_element_type=jnp.float32)
    y = y + b2_ref[...]
    # final leaky, lane-dense (hidden = multiple of 128) store
    o_ref[...] = _leaky(y).astype(o_ref.dtype)


# -----------------------------------------------------------------------------
# Wrapper.  x: [B, n_embd] (f32) -> [B, 2*n_embd] (out_dtype, default f32)
# -----------------------------------------------------------------------------
@functools.partial(jax.jit, static_argnames=("out_dtype",))
def time_embedding(x, params, *, out_dtype=jnp.float32):
    B, n_embd = x.shape
    hidden = params["w1"].shape[1]  # 2 * n_embd

    tb, Bp = _choose_row_tile(B)
    xp = x if Bp == B else jnp.pad(x, ((0, Bp - B), (0, 0)))

    out = pl.pallas_call(
        time_embedding_kernel,
        out_shape=jax.ShapeDtypeStruct((Bp, hidden), out_dtype),
        grid=(Bp // tb,),
        in_specs=[
            pl.BlockSpec((tb, n_embd), lambda i: (i, 0)),        # x rows (tiled)
            pl.BlockSpec((n_embd, hidden), lambda i: (0, 0)),    # w1 (resident, f32)
            pl.BlockSpec((1, hidden), lambda i: (0, 0)),         # b1
            pl.BlockSpec((hidden, hidden), lambda i: (0, 0)),    # w2 (resident, bf16)
            pl.BlockSpec((1, hidden), lambda i: (0, 0)),         # b2
        ],
        out_specs=pl.BlockSpec((tb, hidden), lambda i: (i, 0)),
        compiler_params=pltpu.CompilerParams(
            dimension_semantics=("parallel",),  # row tiles are independent
        ),
    )(xp, params["w1"], params["b1"], params["w2"], params["b2"])

    return out if Bp == B else out[:B]


# -----------------------------------------------------------------------------
# Deterministic synthetic parameters (shapes follow nn.Linear(n_embd, 2n), (2n, 2n)).
# Weights stored [in, out]; w1 stays f32 (accuracy), w2 stored bf16 (kernel layout).
# -----------------------------------------------------------------------------
def init_params(key, n_embd):
    hidden = 2 * n_embd
    k1, k2, k3, k4 = jax.random.split(key, 4)
    s1 = 1.0 / jnp.sqrt(n_embd)
    s2 = 1.0 / jnp.sqrt(hidden)
    w1 = jax.random.uniform(k1, (n_embd, hidden), jnp.float32, -1.0, 1.0) * s1
    b1 = jax.random.uniform(k2, (1, hidden), jnp.float32, -1.0, 1.0) * s1
    w2 = jax.random.uniform(k3, (hidden, hidden), jnp.float32, -1.0, 1.0) * s2
    b2 = jax.random.uniform(k4, (1, hidden), jnp.float32, -1.0, 1.0) * s2
    return dict(
        w1=w1, b1=b1,
        w2=w2.astype(jnp.bfloat16), b2=b2,
    )


# -----------------------------------------------------------------------------
# Pure-JAX f32 reference mirroring the PyTorch forward (same bf16-quantized w2
# upcast to f32, so the comparison isolates the kernel's numerics).
# -----------------------------------------------------------------------------
def reference(x, params):
    w1 = params["w1"].astype(jnp.float32)
    w2 = params["w2"].astype(jnp.float32)
    h = x @ w1 + params["b1"]
    h = _leaky(h)
    h = _silu(h)
    y = h @ w2 + params["b2"]
    return _leaky(y)


if __name__ == "__main__":
    B, n_embd = 2, 128          # hidden = 2 * n_embd = 256 (lane-dense output)

    key = jax.random.PRNGKey(0)
    k_x, k_p = jax.random.split(key)
    x = jax.random.normal(k_x, (B, n_embd), jnp.float32)
    params = init_params(k_p, n_embd)

    out = time_embedding(x, params)
    out = jax.block_until_ready(out)

    ref = reference(x, params)
    assert out.shape == (B, 2 * n_embd), out.shape
    assert bool(jnp.isfinite(out).all())
    max_err = float(jnp.max(jnp.abs(out - ref)))
    assert max_err < 5e-2, f"max abs err {max_err}"

    print("KERNEL_OK")
</pallas_src>

<mosaic_0001>
module attributes {stable_mosaic.version = 11 : i64} {
  func.func @time_embedding_kernel(%arg0: i32, %arg1: memref<8x128xf32, #tpu.memory_space<vmem>>, %arg2: memref<128x256xf32, #tpu.memory_space<vmem>>, %arg3: memref<1x256xf32, #tpu.memory_space<vmem>>, %arg4: memref<256x256xbf16, #tpu.memory_space<vmem>>, %arg5: memref<1x256xf32, #tpu.memory_space<vmem>>, %arg6: memref<8x256xf32, #tpu.memory_space<vmem>>) attributes {dimension_semantics = [#tpu.dimension_semantics<parallel>], iteration_bounds = array<i64: 1>, scalar_prefetch = 0 : i64, scratch_operands = 0 : i64, tpu.core_type = #tpu.core_type<tc>, window_params = [{transform_indices = @transform_0, window_bounds = array<i64: 8, 128>}, {pipeline_mode = #tpu.pipeline_mode<synchronous>, transform_indices = @transform_1, window_bounds = array<i64: 128, 256>}, {pipeline_mode = #tpu.pipeline_mode<synchronous>, transform_indices = @transform_2, window_bounds = array<i64: 1, 256>}, {pipeline_mode = #tpu.pipeline_mode<synchronous>, transform_indices = @transform_3, window_bounds = array<i64: 256, 256>}, {pipeline_mode = #tpu.pipeline_mode<synchronous>, transform_indices = @transform_4, window_bounds = array<i64: 1, 256>}, {transform_indices = @transform_5, window_bounds = array<i64: 8, 256>}]} {
    %c0 = arith.constant 0 : index
    %c0_0 = arith.constant 0 : index
    %0 = vector.load %arg1[%c0, %c0_0] : memref<8x128xf32, #tpu.memory_space<vmem>>, vector<8x128xf32>
    %c0_1 = arith.constant 0 : index
    %c0_2 = arith.constant 0 : index
    %1 = vector.load %arg2[%c0_1, %c0_2] : memref<128x256xf32, #tpu.memory_space<vmem>>, vector<128x256xf32>
    %cst = arith.constant dense<0.000000e+00> : vector<8x256xf32>
    %2 = tpu.matmul %0, %1, %cst {dimension_numbers = #tpu.dot_dimension_numbers<[1], [0], [0], [1], [0, 0, 1, 1], [], []>} : vector<8x128xf32>, vector<128x256xf32>, vector<8x256xf32> -> vector<8x256xf32>
    %c0_3 = arith.constant 0 : index
    %c0_4 = arith.constant 0 : index
    %3 = vector.load %arg3[%c0_3, %c0_4] : memref<1x256xf32, #tpu.memory_space<vmem>>, vector<1x256xf32>
    %4 = vector.broadcast %3 : vector<1x256xf32> to vector<8x256xf32>
    %5 = arith.addf %2, %4 : vector<8x256xf32>
    %cst_5 = arith.constant 0.000000e+00 : f32
    %6 = vector.broadcast %cst_5 : f32 to vector<8x256xf32>
    %7 = arith.cmpf oge, %5, %6 : vector<8x256xf32>
    %cst_6 = arith.constant 3.000000e-01 : f32
    %8 = vector.broadcast %cst_6 : f32 to vector<8x256xf32>
    %9 = arith.mulf %8, %5 : vector<8x256xf32>
    %10 = arith.select %7, %5, %9 : vector<8x256xi1>, vector<8x256xf32>
    %11 = arith.negf %10 : vector<8x256xf32>
    %12 = math.exp %11 : vector<8x256xf32>
    %cst_7 = arith.constant 1.000000e+00 : f32
    %13 = vector.broadcast %cst_7 : f32 to vector<8x256xf32>
    %14 = arith.addf %13, %12 : vector<8x256xf32>
    %15 = arith.divf %13, %14 : vector<8x256xf32>
    %16 = arith.mulf %10, %15 : vector<8x256xf32>
    %17 = arith.truncf %16 : vector<8x256xf32> to vector<8x256xbf16>
    %c0_8 = arith.constant 0 : index
    %c0_9 = arith.constant 0 : index
    %18 = vector.load %arg4[%c0_8, %c0_9] : memref<256x256xbf16, #tpu.memory_space<vmem>>, vector<256x256xbf16>
    %cst_10 = arith.constant dense<0.000000e+00> : vector<8x256xf32>
    %19 = tpu.matmul %17, %18, %cst_10 {dimension_numbers = #tpu.dot_dimension_numbers<[1], [0], [0], [1], [0, 0, 1, 1], [], []>} : vector<8x256xbf16>, vector<256x256xbf16>, vector<8x256xf32> -> vector<8x256xf32>
    %c0_11 = arith.constant 0 : index
    %c0_12 = arith.constant 0 : index
    %20 = vector.load %arg5[%c0_11, %c0_12] : memref<1x256xf32, #tpu.memory_space<vmem>>, vector<1x256xf32>
    %21 = vector.broadcast %20 : vector<1x256xf32> to vector<8x256xf32>
    %22 = arith.addf %19, %21 : vector<8x256xf32>
    %cst_13 = arith.constant 0.000000e+00 : f32
    %23 = vector.broadcast %cst_13 : f32 to vector<8x256xf32>
    %24 = arith.cmpf oge, %22, %23 : vector<8x256xf32>
    %cst_14 = arith.constant 3.000000e-01 : f32
    %25 = vector.broadcast %cst_14 : f32 to vector<8x256xf32>
    %26 = arith.mulf %25, %22 : vector<8x256xf32>
    %27 = arith.select %24, %22, %26 : vector<8x256xi1>, vector<8x256xf32>
    %c0_15 = arith.constant 0 : index
    %c0_16 = arith.constant 0 : index
    %28 = vector.load %arg6[%c0_15, %c0_16] : memref<8x256xf32, #tpu.memory_space<vmem>>, vector<8x256xf32>
    tpu.vector_store %arg6[%c0_15, %c0_16], %27 {strides = array<i32>} : memref<8x256xf32, #tpu.memory_space<vmem>>, vector<8x256xf32>,
    return
  }
  func.func @transform_0(%arg0: i32) -> (i32, i32) {
    %c0_i32 = arith.constant 0 : i32
    %c0_i32_0 = arith.constant 0 : i32
    return %arg0, %c0_i32 : i32, i32
  }
  func.func @transform_1(%arg0: i32) -> (i32, i32) {
    %c0_i32 = arith.constant 0 : i32
    %c0_i32_0 = arith.constant 0 : i32
    %c0_i32_1 = arith.constant 0 : i32
    return %c0_i32, %c0_i32_0 : i32, i32
  }
  func.func @transform_2(%arg0: i32) -> (i32, i32) {
    %c0_i32 = arith.constant 0 : i32
    %c0_i32_0 = arith.constant 0 : i32
    %c0_i32_1 = arith.constant 0 : i32
    return %c0_i32, %c0_i32_0 : i32, i32
  }
  func.func @transform_3(%arg0: i32) -> (i32, i32) {
    %c0_i32 = arith.constant 0 : i32
    %c0_i32_0 = arith.constant 0 : i32
    %c0_i32_1 = arith.constant 0 : i32
    return %c0_i32, %c0_i32_0 : i32, i32
  }
  func.func @transform_4(%arg0: i32) -> (i32, i32) {
    %c0_i32 = arith.constant 0 : i32
    %c0_i32_0 = arith.constant 0 : i32
    %c0_i32_1 = arith.constant 0 : i32
    return %c0_i32, %c0_i32_0 : i32, i32
  }
  func.func @transform_5(%arg0: i32) -> (i32, i32) {
    %c0_i32 = arith.constant 0 : i32
    %c0_i32_0 = arith.constant 0 : i32
    return %arg0, %c0_i32 : i32, i32
  }
}

</mosaic_0001>

<llo_original>
// kernel: time_embedding.1
$region0: #{time_embedding.1}
  #allocation0 [shape = 'u32[]', space=smem, size = 0x4, offset = 0x4, fixed_abs, tag = 'smem constant byte address 0x4 - core index']
  #allocation1 [shape = 'u32[144,128]{1,0:T(1,128)}', space=vmem, size = 0x12000, scoped, tag = 'internal scratch']
  %s0 = inlined_call_operand.vmem [shape: f32[8,128], index: 0, kind: input, shape index: {}]
  %s1 = inlined_call_operand.hbm [shape: f32[128,256], index: 1, kind: input, shape index: {}]
  %s2 = inlined_call_operand.vmem [shape: f32[1,256], index: 2, kind: input, shape index: {}]
  %s3 = inlined_call_operand.hbm [shape: bf16[256,256], index: 3, kind: input, shape index: {}]
  %s4 = inlined_call_operand.vmem [shape: f32[1,256], index: 4, kind: input, shape index: {}]
  %s5 = inlined_call_operand.vmem [shape: f32[8,256], index: 5, kind: output, shape index: {}]
  %s6 = sld [smem:[#allocation0]]
  $region38: #{time_embedding.1} parent=0
    _
  %s8 = ssub.s32 1, %s6
  %s9 = scalar_select 0, %s8, %s6
  $region1: #{time_embedding.1} parent=0
    #allocation2 [shape = 'u8[131072]{0}', space=vmem, size = 0x20000, scoped, tag = 'input window, operand 1, single buffered']
    #allocation3 [shape = 's32[1]{0}', space=sflag, size = 0x4, scoped, tag = 'scoped memory for time_embedding.1']
    #allocation4 [shape = 'u8[131072]{0}', space=vmem, size = 0x20000, scoped, tag = 'input window, operand 3, single buffered']
    #allocation5 [shape = 's32[1]{0}', space=sflag, size = 0x4, scoped, tag = 'scoped memory for time_embedding.1']
    %10 = vsyncpa [#allocation3], 0
    %11 = vsyncpa [#allocation5], 0
    // Predicated region
    $region2: #{time_embedding.1} parent=1 // pred_check
      _
    $region3: #{time_embedding.1} parent=1 // pred_check_branch
      %13 = sbr.rel (0) target = $region5
    $region4: #{time_embedding.1} parent=1 // pred_region
      _
    $region5: #{time_embedding.1} parent=1 // pred_fallthru
      _
    // Predicated region
    $region6: #{time_embedding.1} parent=1 // pred_check
      _
    $region7: #{time_embedding.1} parent=1 // pred_check_branch
      %15 = sbr.rel (0) target = $region9
    $region8: #{time_embedding.1} parent=1 // pred_region
      %s17 = ssub.s32 4096, 4096
      %18 = vsyncadd [#allocation3], %s17
      %s19 = sshll.u32 [#allocation2], 4
      %s20 = int_to_ptr.vmem [resolvable:$true] %s19
      %25 = dma.hbm_to_vmem [thread:$0]  %s1, 4096, %s20, [#allocation3], 256, 256, 16
    $region9: #{time_embedding.1} parent=1 // pred_fallthru
      _
    // Predicated region
    $region10: #{time_embedding.1} parent=1 // pred_check
      _
    $region11: #{time_embedding.1} parent=1 // pred_check_branch
      %27 = sbr.rel (0) target = $region13
    $region12: #{time_embedding.1} parent=1 // pred_region
      _
    $region13: #{time_embedding.1} parent=1 // pred_fallthru
      _
    // Predicated region
    $region14: #{time_embedding.1} parent=1 // pred_check
      _
    $region15: #{time_embedding.1} parent=1 // pred_check_branch
      %29 = sbr.rel (0) target = $region17
    $region16: #{time_embedding.1} parent=1 // pred_region
      %s31 = ssub.s32 4096, 4096
      %32 = vsyncadd [#allocation5], %s31
      %s33 = sshll.u32 [#allocation4], 4
      %s34 = int_to_ptr.vmem [resolvable:$true] %s33
      %39 = dma.hbm_to_vmem [thread:$0]  %s3, 4096, %s34, [#allocation5], 128, 128, 8
    $region17: #{time_embedding.1} parent=1 // pred_fallthru
      _
    // Predicated region
    $region18: #{time_embedding.1} parent=1 // pred_check
      _
    $region19: #{time_embedding.1} parent=1 // pred_check_branch
      %41 = sbr.rel (0) target = $region21
    $region20: #{time_embedding.1} parent=1 // pred_region
      _
    $region21: #{time_embedding.1} parent=1 // pred_fallthru
      _
    // Predicated region
    $region22: #{time_embedding.1} parent=1 // pred_check
      _
    $region23: #{time_embedding.1} parent=1 // pred_check_branch
      %43 = sbr.rel (0) target = $region25
    $region24: #{time_embedding.1} parent=1 // pred_region
      %44 = dma.done [#allocation3], 4096
    $region25: #{time_embedding.1} parent=1 // pred_fallthru
      _
    // Predicated region
    $region26: #{time_embedding.1} parent=1 // pred_check
      _
    $region27: #{time_embedding.1} parent=1 // pred_check_branch
      %46 = sbr.rel (0) target = $region29
    $region28: #{time_embedding.1} parent=1 // pred_region
      %47 = dma.done [#allocation5], 4096
    $region29: #{time_embedding.1} parent=1 // pred_fallthru
      _
    %v48 = vld [vmem:[%s0] sm:$0xff]
    %v49 = vld [vmem:[#allocation2] sm:$0xff]
    %v50 = vld [vmem:[#allocation2 + $0x8] sm:$0xff]
    %v51 = vld [vmem:[#allocation2 + $0x10] sm:$0xff]
    %v52 = vld [vmem:[#allocation2 + $0x18] sm:$0xff]
    %v53 = vld [vmem:[#allocation2 + $0x20] sm:$0xff]
    %v54 = vld [vmem:[#allocation2 + $0x28] sm:$0xff]
    %v55 = vld [vmem:[#allocation2 + $0x30] sm:$0xff]
    %v56 = vld [vmem:[#allocation2 + $0x38] sm:$0xff]
    %v57 = vld [vmem:[#allocation2 + $0x40] sm:$0xff]
    %v58 = vld [vmem:[#allocation2 + $0x48] sm:$0xff]
    %v59 = vld [vmem:[#allocation2 + $0x50] sm:$0xff]
    %v60 = vld [vmem:[#allocation2 + $0x58] sm:$0xff]
    %v61 = vld [vmem:[#allocation2 + $0x60] sm:$0xff]
    %v62 = vld [vmem:[#allocation2 + $0x68] sm:$0xff]
    %v63 = vld [vmem:[#allocation2 + $0x70] sm:$0xff]
    %v64 = vld [vmem:[#allocation2 + $0x78] sm:$0xff]
    %v65 = vld [vmem:[#allocation2 + $0x80] sm:$0xff]
    %v66 = vld [vmem:[#allocation2 + $0x88] sm:$0xff]
    %v67 = vld [vmem:[#allocation2 + $0x90] sm:$0xff]
    %v68 = vld [vmem:[#allocation2 + $0x98] sm:$0xff]
    %v69 = vld [vmem:[#allocation2 + $0xa0] sm:$0xff]
    %v70 = vld [vmem:[#allocation2 + $0xa8] sm:$0xff]
    %v71 = vld [vmem:[#allocation2 + $0xb0] sm:$0xff]
    %v72 = vld [vmem:[#allocation2 + $0xb8] sm:$0xff]
    %v73 = vld [vmem:[#allocation2 + $0xc0] sm:$0xff]
    %v74 = vld [vmem:[#allocation2 + $0xc8] sm:$0xff]
    %v75 = vld [vmem:[#allocation2 + $0xd0] sm:$0xff]
    %v76 = vld [vmem:[#allocation2 + $0xd8] sm:$0xff]
    %v77 = vld [vmem:[#allocation2 + $0xe0] sm:$0xff]
    %v78 = vld [vmem:[#allocation2 + $0xe8] sm:$0xff]
    %v79 = vld [vmem:[#allocation2 + $0xf0] sm:$0xff]
    %v80 = vld [vmem:[#allocation2 + $0xf8] sm:$0xff]
    %v81 = vld [vmem:[%s2] sm:$0x3]
    %v83 = vlaneseq
    %v84 = vshrl.u32 %v83, 7
    %v85 = vsub.s32 0, %v84
    %v86 = vrot.slane %v81, %v85
    %v87 = vlaneseq
    %v88 = vshrl.u32 %v87, 7
    %v89 = vsub.s32 1, %v88
    %v90 = vrot.slane %v81, %v89
    %93 = vmatprep.subr.mxu0 %v50
    %94 = vmatpush1.msra.mxu0 %v49
    %95 = vmatprep.subr.mxu0 %v52
    %96 = vmatpush1.msra.mxu0 %v51
    %97 = vmatprep.subr.mxu0 %v54
    %98 = vmatpush1.msra.mxu0 %v53
    %99 = vmatprep.subr.mxu0 %v56
    %100 = vmatpush1.msra.mxu0 %v55
    %101 = vmatprep.subr.mxu0 %v58
    %102 = vmatpush1.msra.mxu0 %v57
    %103 = vmatprep.subr.mxu0 %v60
    %104 = vmatpush1.msra.mxu0 %v59
    %105 = vmatprep.subr.mxu0 %v62
    %106 = vmatpush1.msra.mxu0 %v61
    %107 = vmatprep.subr.mxu0 %v64
    %108 = vmatpush1.msra.mxu0 %v63
    %109 = vmatprep.subr.mxu0 %v66
    %110 = vmatpush1.msra.mxu0 %v65
    %111 = vmatprep.subr.mxu0 %v68
    %112 = vmatpush1.msra.mxu0 %v67
    %113 = vmatprep.subr.mxu0 %v70
    %114 = vmatpush1.msra.mxu0 %v69
    %115 = vmatprep.subr.mxu0 %v72
    %116 = vmatpush1.msra.mxu0 %v71
    %117 = vmatprep.subr.mxu0 %v74
    %118 = vmatpush1.msra.mxu0 %v73
    %119 = vmatprep.subr.mxu0 %v76
    %120 = vmatpush1.msra.mxu0 %v75
    %121 = vmatprep.subr.mxu0 %v78
    %122 = vmatpush1.msra.mxu0 %v77
    %123 = vmatprep.subr.mxu0 %v80
    %124 = vmatpush1.msra.mxu0 %v79
    %125 = vmatprep.subr.mxu0 0.0
    %126 = vmatpush1.msra.mxu0 0.0
    %127 = vmatprep.subr.mxu0 0.0
    %128 = vmatpush1.msra.mxu0 0.0
    %129 = vmatprep.subr.mxu0 0.0
    %130 = vmatpush1.msra.mxu0 0.0
    %131 = vmatprep.subr.mxu0 0.0
    %132 = vmatpush1.msra.mxu0 0.0
    %133 = vmatprep.subr.mxu0 0.0
    %134 = vmatpush1.msra.mxu0 0.0
    %135 = vmatprep.subr.mxu0 0.0
    %136 = vmatpush1.msra.mxu0 0.0
    %137 = vmatprep.subr.mxu0 0.0
    %138 = vmatpush1.msra.mxu0 0.0
    %139 = vmatprep.subr.mxu0 0.0
    %140 = vmatpush1.msra.mxu0 0.0
    %141 = vmatprep.subr.mxu0 0.0
    %142 = vmatpush1.msra.mxu0 0.0
    %143 = vmatprep.subr.mxu0 0.0
    %144 = vmatpush1.msra.mxu0 0.0
    %145 = vmatprep.subr.mxu0 0.0
    %146 = vmatpush1.msra.mxu0 0.0
    %147 = vmatprep.subr.mxu0 0.0
    %148 = vmatpush1.msra.mxu0 0.0
    %149 = vmatprep.subr.mxu0 0.0
    %150 = vmatpush1.msra.mxu0 0.0
    %151 = vmatprep.subr.mxu0 0.0
    %152 = vmatpush1.msra.mxu0 0.0
    %153 = vmatprep.subr.mxu0 0.0
    %154 = vmatpush1.msra.mxu0 0.0
    %155 = vmatprep.subr.mxu0 0.0
    %156 = vmatpush1.msra.mxu0 0.0
    %157 = vmatprep.mubr.f32.mxu0 0.0
    %158 = vmatmul.mubr.f32.gmra.mrb[0].mxu0 %v48
    %v159 = vpop.f32.mrb[0].mxu0
    %v160 = vadd.f32 %v86, %v159
    %v161 = vpop.f32.mrb[0].mxu0
    %v162 = vadd.f32 %v90, %v161
    %163 = vdwg.mxu0
    %vm164 = vcmp.ge.f32.partialorder %v160, 0.0
    %vm165 = vcmp.ge.f32.partialorder %v162, 0.0
    %v166 = vmul.f32 %v160, 0.3
    %v167 = vmul.f32 %v162, 0.3
    %v168 = vsel %vm164, %v160, %v166
    %v169 = vsel %vm165, %v162, %v167
    %v170 = vxor.u32 %v168, 2147483648
    %v171 = vxor.u32 %v169, 2147483648
    %v172 = vmul.f32 %v170, 1.442695
    %v173 = vpow.pop %v172
    %v174 = vmul.f32 %v171, 1.442695
    %v175 = vpow.pop %v174
    %v176 = vadd.f32 %v173, 1.0
    %v177 = vadd.f32 %v175, 1.0
    %v178 = vrcp.pop %v176
    %v179 = vmul.f32 1.0, %v178
    %v180 = vrcp.pop %v177
    %v181 = vmul.f32 1.0, %v180
    %v182 = vmul.f32 %v168, %v179
    %v183 = vmul.f32 %v169, %v181
    %v184 = vpack.c.bf16 %v182, %v182
    %v185 = vpack.c.bf16 %v183, %v183
    %v186 = vld [vmem:[#allocation4] sm:$0xff]
    %v187 = vld [vmem:[#allocation4 + $0x8] sm:$0xff]
    %v188 = vld [vmem:[#allocation4 + $0x10] sm:$0xff]
    %v189 = vld [vmem:[#allocation4 + $0x18] sm:$0xff]
    %v190 = vld [vmem:[#allocation4 + $0x20] sm:$0xff]
    %v191 = vld [vmem:[#allocation4 + $0x28] sm:$0xff]
    %v192 = vld [vmem:[#allocation4 + $0x30] sm:$0xff]
    %v193 = vld [vmem:[#allocation4 + $0x38] sm:$0xff]
    %v194 = vld [vmem:[#allocation4 + $0x40] sm:$0xff]
    %v195 = vld [vmem:[#allocation4 + $0x48] sm:$0xff]
    %v196 = vld [vmem:[#allocation4 + $0x50] sm:$0xff]
    %v197 = vld [vmem:[#allocation4 + $0x58] sm:$0xff]
    %v198 = vld [vmem:[#allocation4 + $0x60] sm:$0xff]
    %v199 = vld [vmem:[#allocation4 + $0x68] sm:$0xff]
    %v200 = vld [vmem:[#allocation4 + $0x70] sm:$0xff]
    %v201 = vld [vmem:[#allocation4 + $0x78] sm:$0xff]
    %v202 = vld [vmem:[#allocation4 + $0x80] sm:$0xff]
    %v203 = vld [vmem:[#allocation4 + $0x88] sm:$0xff]
    %v204 = vld [vmem:[#allocation4 + $0x90] sm:$0xff]
    %v205 = vld [vmem:[#allocation4 + $0x98] sm:$0xff]
    %v206 = vld [vmem:[#allocation4 + $0xa0] sm:$0xff]
    %v207 = vld [vmem:[#allocation4 + $0xa8] sm:$0xff]
    %v208 = vld [vmem:[#allocation4 + $0xb0] sm:$0xff]
    %v209 = vld [vmem:[#allocation4 + $0xb8] sm:$0xff]
    %v210 = vld [vmem:[#allocation4 + $0xc0] sm:$0xff]
    %v211 = vld [vmem:[#allocation4 + $0xc8] sm:$0xff]
    %v212 = vld [vmem:[#allocation4 + $0xd0] sm:$0xff]
    %v213 = vld [vmem:[#allocation4 + $0xd8] sm:$0xff]
    %v214 = vld [vmem:[#allocation4 + $0xe0] sm:$0xff]
    %v215 = vld [vmem:[#allocation4 + $0xe8] sm:$0xff]
    %v216 = vld [vmem:[#allocation4 + $0xf0] sm:$0xff]
    %v217 = vld [vmem:[#allocation4 + $0xf8] sm:$0xff]
    %v218 = vld [vmem:[%s4] sm:$0x3]
    %v220 = vlaneseq
    %v221 = vshrl.u32 %v220, 7
    %v222 = vsub.s32 0, %v221
    %v223 = vrot.slane %v218, %v222
    %v224 = vlaneseq
    %v225 = vshrl.u32 %v224, 7
    %v226 = vsub.s32 1, %v225
    %v227 = vrot.slane %v218, %v226
    %v262 = vunpack.c.l.b16 %v186
    %v263 = vunpack.c.h.b16 %v186
    %v264 = vunpack.c.l.b16 %v187
    %v265 = vunpack.c.h.b16 %v187
    %v266 = vunpack.c.l.b16 %v188
    %v267 = vunpack.c.h.b16 %v188
    %v268 = vunpack.c.l.b16 %v189
    %v269 = vunpack.c.h.b16 %v189
    %v270 = vunpack.c.l.b16 %v190
    %v271 = vunpack.c.h.b16 %v190
    %v272 = vunpack.c.l.b16 %v191
    %v273 = vunpack.c.h.b16 %v191
    %v274 = vunpack.c.l.b16 %v192
    %v275 = vunpack.c.h.b16 %v192
    %v276 = vunpack.c.l.b16 %v193
    %v277 = vunpack.c.h.b16 %v193
    %v278 = vunpack.c.l.b16 %v194
    %v279 = vunpack.c.h.b16 %v194
    %v280 = vunpack.c.l.b16 %v195
    %v281 = vunpack.c.h.b16 %v195
    %v282 = vunpack.c.l.b16 %v196
    %v283 = vunpack.c.h.b16 %v196
    %v284 = vunpack.c.l.b16 %v197
    %v285 = vunpack.c.h.b16 %v197
    %v286 = vunpack.c.l.b16 %v198
    %v287 = vunpack.c.h.b16 %v198
    %v288 = vunpack.c.l.b16 %v199
    %v289 = vunpack.c.h.b16 %v199
    %v290 = vunpack.c.l.b16 %v200
    %v291 = vunpack.c.h.b16 %v200
    %v292 = vunpack.c.l.b16 %v201
    %v293 = vunpack.c.h.b16 %v201
    %v294 = vunpack.c.l.b16 %v202
    %v295 = vunpack.c.h.b16 %v202
    %v296 = vunpack.c.l.b16 %v203
    %v297 = vunpack.c.h.b16 %v203
    %v298 = vunpack.c.l.b16 %v204
    %v299 = vunpack.c.h.b16 %v204
    %v300 = vunpack.c.l.b16 %v205
    %v301 = vunpack.c.h.b16 %v205
    %v302 = vunpack.c.l.b16 %v206
    %v303 = vunpack.c.h.b16 %v206
    %v304 = vunpack.c.l.b16 %v207
    %v305 = vunpack.c.h.b16 %v207
    %v306 = vunpack.c.l.b16 %v208
    %v307 = vunpack.c.h.b16 %v208
    %v308 = vunpack.c.l.b16 %v209
    %v309 = vunpack.c.h.b16 %v209
    %v310 = vunpack.c.l.b16 %v210
    %v311 = vunpack.c.h.b16 %v210
    %v312 = vunpack.c.l.b16 %v211
    %v313 = vunpack.c.h.b16 %v211
    %v314 = vunpack.c.l.b16 %v212
    %v315 = vunpack.c.h.b16 %v212
    %v316 = vunpack.c.l.b16 %v213
    %v317 = vunpack.c.h.b16 %v213
    %v318 = vunpack.c.l.b16 %v214
    %v319 = vunpack.c.h.b16 %v214
    %v320 = vunpack.c.l.b16 %v215
    %v321 = vunpack.c.h.b16 %v215
    %v322 = vunpack.c.l.b16 %v216
    %v323 = vunpack.c.h.b16 %v216
    %v324 = vunpack.c.l.b16 %v217
    %v325 = vunpack.c.h.b16 %v217
    %v326 = vpack.c.b16 %v264, %v262
    %v327 = vpack.c.b16 %v265, %v263
    %v328 = vpack.c.b16 %v268, %v266
    %v329 = vpack.c.b16 %v269, %v267
    %v330 = vpack.c.b16 %v272, %v270
    %v331 = vpack.c.b16 %v273, %v271
    %v332 = vpack.c.b16 %v276, %v274
    %v333 = vpack.c.b16 %v277, %v275
    %v334 = vpack.c.b16 %v280, %v278
    %v335 = vpack.c.b16 %v281, %v279
    %v336 = vpack.c.b16 %v284, %v282
    %v337 = vpack.c.b16 %v285, %v283
    %v338 = vpack.c.b16 %v288, %v286
    %v339 = vpack.c.b16 %v289, %v287
    %v340 = vpack.c.b16 %v292, %v290
    %v341 = vpack.c.b16 %v293, %v291
    %v342 = vpack.c.b16 %v296, %v294
    %v343 = vpack.c.b16 %v297, %v295
    %v344 = vpack.c.b16 %v300, %v298
    %v345 = vpack.c.b16 %v301, %v299
    %v346 = vpack.c.b16 %v304, %v302
    %v347 = vpack.c.b16 %v305, %v303
    %v348 = vpack.c.b16 %v308, %v306
    %v349 = vpack.c.b16 %v309, %v307
    %v350 = vpack.c.b16 %v312, %v310
    %v351 = vpack.c.b16 %v313, %v311
    %v352 = vpack.c.b16 %v316, %v314
    %v353 = vpack.c.b16 %v317, %v315
    %v354 = vpack.c.b16 %v320, %v318
    %v355 = vpack.c.b16 %v321, %v319
    %v356 = vpack.c.b16 %v324, %v322
    %v357 = vpack.c.b16 %v325, %v323
    %390 = vmatprep.subr.bf16.mxu0 %v327
    %391 = vmatpush1.bf16.msra.mxu0 %v326
    %392 = vmatprep.subr.bf16.mxu0 %v329
    %393 = vmatpush1.bf16.msra.mxu0 %v328
    %394 = vmatprep.subr.bf16.mxu0 %v331
    %395 = vmatpush1.bf16.msra.mxu0 %v330
    %396 = vmatprep.subr.bf16.mxu0 %v333
    %397 = vmatpush1.bf16.msra.mxu0 %v332
    %398 = vmatprep.subr.bf16.mxu0 %v335
    %399 = vmatpush1.bf16.msra.mxu0 %v334
    %400 = vmatprep.subr.bf16.mxu0 %v337
    %401 = vmatpush1.bf16.msra.mxu0 %v336
    %402 = vmatprep.subr.bf16.mxu0 %v339
    %403 = vmatpush1.bf16.msra.mxu0 %v338
    %404 = vmatprep.subr.bf16.mxu0 %v341
    %405 = vmatpush1.bf16.msra.mxu0 %v340
    %406 = vmatprep.subr.bf16.mxu0 %v343
    %407 = vmatpush1.bf16.msra.mxu0 %v342
    %408 = vmatprep.subr.bf16.mxu0 %v345
    %409 = vmatpush1.bf16.msra.mxu0 %v344
    %410 = vmatprep.subr.bf16.mxu0 %v347
    %411 = vmatpush1.bf16.msra.mxu0 %v346
    %412 = vmatprep.subr.bf16.mxu0 %v349
    %413 = vmatpush1.bf16.msra.mxu0 %v348
    %414 = vmatprep.subr.bf16.mxu0 %v351
    %415 = vmatpush1.bf16.msra.mxu0 %v350
    %416 = vmatprep.subr.bf16.mxu0 %v353
    %417 = vmatpush1.bf16.msra.mxu0 %v352
    %418 = vmatprep.subr.bf16.mxu0 %v355
    %419 = vmatpush1.bf16.msra.mxu0 %v354
    %420 = vmatprep.subr.bf16.mxu0 %v357
    %421 = vmatpush1.bf16.msra.mxu0 %v356
    %422 = vmatprep.mubr.bf16.mxu0 %v185
    %423 = vmatmul.mubr.bf16.gmra.mrb[0].mxu0 %v184
    %v424 = vpop.f32.mrb[0].mxu0
    %v425 = vadd.f32 %v223, %v424
    %v426 = vpop.f32.mrb[0].mxu0
    %v427 = vadd.f32 %v227, %v426
    %v428 = vpop.f32.mrb[0].mxu0
    %v429 = vpop.f32.mrb[0].mxu0
    %430 = vdwg.mxu0
    %vm431 = vcmp.ge.f32.partialorder %v425, 0.0
    %vm432 = vcmp.ge.f32.partialorder %v427, 0.0
    %v433 = vmul.f32 %v425, 0.3
    %v434 = vmul.f32 %v427, 0.3
    %v435 = vsel %vm431, %v425, %v433
    %v436 = vsel %vm432, %v427, %v434
    %437 = vst [vmem:[%s5] sm:$0xff] %v435
    %438 = vst [vmem:[%s5 + $0x8] sm:$0xff] %v436
    // Predicated region
    $region30: #{time_embedding.1} parent=1 // pred_check
      _
    $region31: #{time_embedding.1} parent=1 // pred_check_branch
      %440 = sbr.rel (0) target = $region33
    $region32: #{time_embedding.1} parent=1 // pred_region
      _
    $region33: #{time_embedding.1} parent=1 // pred_fallthru
      _
    // Predicated region
    $region34: #{time_embedding.1} parent=1 // pred_check
      _
    $region35: #{time_embedding.1} parent=1 // pred_check_branch
      %442 = sbr.rel (0) target = $region37
    $region36: #{time_embedding.1} parent=1 // pred_region
      _
    $region37: #{time_embedding.1} parent=1 // pred_fallthru
      _
    %443 = vsyncpa [#allocation3], 1
    %444 = vsyncpa [#allocation5], 1

</llo_original>
